<compile_context>
chip_gen: v6e
topology: v6e:2x2x1
jax: 0.10.0
libtpu: 0.0.40
codegen_flags: <defaults>
</compile_context>

<pallas_src>
import functools

import jax
import jax.numpy as jnp
from jax.experimental import pallas as pl
from jax.experimental.pallas import tpu as pltpu

_EPS = 1e-5


# ----------------------------------------------------------------------------
# Small helpers
# ----------------------------------------------------------------------------
def _round_up(x, m):
    return ((x + m - 1) // m) * m


def _pick_tk(K):
    """K-tile for the matmul: multiple of 128; single step when K is small,
    otherwise a divisor of the padded K that minimizes padding waste."""
    kp = _round_up(K, 128)
    if kp <= 768:
        return kp
    for cand in (512, 384, 256):
        if kp % cand == 0:
            return cand
    return 512


def _row_tile(n_rows, bytes_per_row, budget=2 * 1024 * 1024, cap=512):
    """Row-tile (multiple of 8) for memory-bound elementwise/reduction kernels,
    sized so one block stays well under a couple of MiB (v7x-safe)."""
    t = max(8, min(cap, budget // max(1, bytes_per_row)))
    t = (t // 8) * 8
    return max(8, min(t, _round_up(n_rows, 8)))


# ----------------------------------------------------------------------------
# Pallas kernel bodies
# ----------------------------------------------------------------------------
def _matmul_kernel(a_ref, b_ref, *rest, has_bias):
    """Tiled matmul: bf16 operands, f32 accumulation in VMEM scratch."""
    if has_bias:
        bias_ref, o_ref, acc_ref = rest
    else:
        bias_ref = None
        o_ref, acc_ref = rest
    k = pl.program_id(2)

    @pl.when(k == 0)
    def _():
        acc_ref[...] = jnp.zeros_like(acc_ref)

    acc_ref[...] += jnp.dot(a_ref[...], b_ref[...],
                            preferred_element_type=jnp.float32)

    @pl.when(k == pl.num_programs(2) - 1)
    def _():
        r = acc_ref[...]
        if has_bias:
            r = r + bias_ref[...]
        o_ref[...] = r.astype(o_ref.dtype)


def _bn_stats_kernel(x_ref, sum_ref, sq_ref, acc_s, acc_q):
    """Per-column sum / sum-of-squares accumulated across the M grid axis."""
    i = pl.program_id(0)

    @pl.when(i == 0)
    def _():
        acc_s[...] = jnp.zeros_like(acc_s)
        acc_q[...] = jnp.zeros_like(acc_q)

    x = x_ref[...]
    acc_s[...] += jnp.sum(x, axis=0, keepdims=True)
    acc_q[...] += jnp.sum(x * x, axis=0, keepdims=True)

    @pl.when(i == pl.num_programs(0) - 1)
    def _():
        sum_ref[...] = acc_s[...]
        sq_ref[...] = acc_q[...]


def _affine_act_kernel(x_ref, scale_ref, shift_ref, o_ref, *, relu):
    """Fused BN normalize (precomputed scale/shift) + optional ReLU."""
    y = x_ref[...] * scale_ref[...] + shift_ref[...]
    if relu:
        y = jnp.maximum(y, 0.0)
    o_ref[...] = y.astype(o_ref.dtype)


def _gap_se_kernel(x_ref, w1_ref, b1_ref, w2_ref, b2_ref, o_ref, acc_ref, *,
                   inv_hw):
    """Fused SEBlock: GAP accumulation + Linear->ReLU->Linear->Sigmoid."""
    h = pl.program_id(0)

    @pl.when(h == 0)
    def _():
        acc_ref[...] = jnp.zeros_like(acc_ref)

    acc_ref[...] += jnp.sum(x_ref[...], axis=1)

    @pl.when(h == pl.num_programs(0) - 1)
    def _():
        pooled = acc_ref[...] * inv_hw
        hdn = jnp.dot(pooled, w1_ref[...], preferred_element_type=jnp.float32)
        hdn = jnp.maximum(hdn + b1_ref[...], 0.0)
        z = jnp.dot(hdn, w2_ref[...], preferred_element_type=jnp.float32)
        z = z + b2_ref[...]
        o_ref[...] = (1.0 / (1.0 + jnp.exp(-z))).astype(o_ref.dtype)


def _se_residual_kernel(x2_ref, s_ref, x1_ref, o_ref):
    """out = x2 * se_scale + x1 (per-sample, per-channel scale broadcast)."""
    o_ref[...] = (x2_ref[...] * s_ref[...] + x1_ref[...]).astype(o_ref.dtype)


def _head_kernel(x_ref, w_ref, b_ref, g_ref, bt_ref, o_ref, acc_ref, *,
                 inv_hw, eps):
    """Fused head: GAP accumulation + Linear(512,E) + BatchNorm1d(E)."""
    h = pl.program_id(0)

    @pl.when(h == 0)
    def _():
        acc_ref[...] = jnp.zeros_like(acc_ref)

    acc_ref[...] += jnp.sum(x_ref[...], axis=1)

    @pl.when(h == pl.num_programs(0) - 1)
    def _():
        pooled = acc_ref[...] * inv_hw
        y = jnp.dot(pooled, w_ref[...],
                    preferred_element_type=jnp.float32) + b_ref[...]
        mean = jnp.mean(y, axis=0, keepdims=True)
        var = jnp.mean(y * y, axis=0, keepdims=True) - mean * mean
        o_ref[...] = (g_ref[...] * (y - mean) * jax.lax.rsqrt(var + eps)
                      + bt_ref[...]).astype(o_ref.dtype)


# ----------------------------------------------------------------------------
# pallas_call builders (cached per shape / tiling)
# ----------------------------------------------------------------------------
@functools.lru_cache(maxsize=None)
def _matmul_call(Mp, Kp, Np, tm, tk, tn, has_bias):
    in_specs = [pl.BlockSpec((tm, tk), lambda i, j, k: (i, k)),
                pl.BlockSpec((tk, tn), lambda i, j, k: (k, j))]
    if has_bias:
        in_specs.append(pl.BlockSpec((1, tn), lambda i, j, k: (0, j)))
    return pl.pallas_call(
        functools.partial(_matmul_kernel, has_bias=has_bias),
        out_shape=jax.ShapeDtypeStruct((Mp, Np), jnp.float32),
        grid_spec=pltpu.PrefetchScalarGridSpec(
            num_scalar_prefetch=0,
            grid=(Mp // tm, Np // tn, Kp // tk),
            in_specs=in_specs,
            out_specs=pl.BlockSpec((tm, tn), lambda i, j, k: (i, j)),
            scratch_shapes=[pltpu.VMEM((tm, tn), jnp.float32)],
        ),
        compiler_params=pltpu.CompilerParams(
            dimension_semantics=("parallel", "parallel", "arbitrary")),
    )


@functools.lru_cache(maxsize=None)
def _bn_stats_call(Mp, C, tm):
    return pl.pallas_call(
        _bn_stats_kernel,
        out_shape=(jax.ShapeDtypeStruct((1, C), jnp.float32),
                   jax.ShapeDtypeStruct((1, C), jnp.float32)),
        grid_spec=pltpu.PrefetchScalarGridSpec(
            num_scalar_prefetch=0,
            grid=(Mp // tm,),
            in_specs=[pl.BlockSpec((tm, C), lambda i: (i, 0))],
            out_specs=(pl.BlockSpec((1, C), lambda i: (0, 0)),
                       pl.BlockSpec((1, C), lambda i: (0, 0))),
            scratch_shapes=[pltpu.VMEM((1, C), jnp.float32),
                            pltpu.VMEM((1, C), jnp.float32)],
        ),
        compiler_params=pltpu.CompilerParams(
            dimension_semantics=("arbitrary",)),
    )


@functools.lru_cache(maxsize=None)
def _affine_call(Mp, C, tm, relu, out_dtype_name):
    out_dtype = jnp.dtype(out_dtype_name)
    return pl.pallas_call(
        functools.partial(_affine_act_kernel, relu=relu),
        out_shape=jax.ShapeDtypeStruct((Mp, C), out_dtype),
        grid_spec=pltpu.PrefetchScalarGridSpec(
            num_scalar_prefetch=0,
            grid=(Mp // tm,),
            in_specs=[pl.BlockSpec((tm, C), lambda i: (i, 0)),
                      pl.BlockSpec((1, C), lambda i: (0, 0)),
                      pl.BlockSpec((1, C), lambda i: (0, 0))],
            out_specs=pl.BlockSpec((tm, C), lambda i: (i, 0)),
        ),
        compiler_params=pltpu.CompilerParams(
            dimension_semantics=("parallel",)),
    )


@functools.lru_cache(maxsize=None)
def _gap_se_call(N, HWp, C, R, thw, inv_hw):
    return pl.pallas_call(
        functools.partial(_gap_se_kernel, inv_hw=inv_hw),
        out_shape=jax.ShapeDtypeStruct((N, C), jnp.float32),
        grid_spec=pltpu.PrefetchScalarGridSpec(
            num_scalar_prefetch=0,
            grid=(HWp // thw,),
            in_specs=[pl.BlockSpec((N, thw, C), lambda h: (0, h, 0)),
                      pl.BlockSpec((C, R), lambda h: (0, 0)),
                      pl.BlockSpec((1, R), lambda h: (0, 0)),
                      pl.BlockSpec((R, C), lambda h: (0, 0)),
                      pl.BlockSpec((1, C), lambda h: (0, 0))],
            out_specs=pl.BlockSpec((N, C), lambda h: (0, 0)),
            scratch_shapes=[pltpu.VMEM((N, C), jnp.float32)],
        ),
        compiler_params=pltpu.CompilerParams(
            dimension_semantics=("arbitrary",)),
    )


@functools.lru_cache(maxsize=None)
def _se_res_call(N, HWp, C, thw):
    return pl.pallas_call(
        _se_residual_kernel,
        out_shape=jax.ShapeDtypeStruct((N, HWp, C), jnp.float32),
        grid_spec=pltpu.PrefetchScalarGridSpec(
            num_scalar_prefetch=0,
            grid=(N, HWp // thw),
            in_specs=[pl.BlockSpec((1, thw, C), lambda n, h: (n, h, 0)),
                      pl.BlockSpec((1, 1, C), lambda n, h: (n, 0, 0)),
                      pl.BlockSpec((1, thw, C), lambda n, h: (n, h, 0))],
            out_specs=pl.BlockSpec((1, thw, C), lambda n, h: (n, h, 0)),
        ),
        compiler_params=pltpu.CompilerParams(
            dimension_semantics=("parallel", "parallel")),
    )


@functools.lru_cache(maxsize=None)
def _head_call(N, HWp, C, E, thw, inv_hw):
    return pl.pallas_call(
        functools.partial(_head_kernel, inv_hw=inv_hw, eps=_EPS),
        out_shape=jax.ShapeDtypeStruct((N, E), jnp.float32),
        grid_spec=pltpu.PrefetchScalarGridSpec(
            num_scalar_prefetch=0,
            grid=(HWp // thw,),
            in_specs=[pl.BlockSpec((N, thw, C), lambda h: (0, h, 0)),
                      pl.BlockSpec((C, E), lambda h: (0, 0)),
                      pl.BlockSpec((1, E), lambda h: (0, 0)),
                      pl.BlockSpec((1, E), lambda h: (0, 0)),
                      pl.BlockSpec((1, E), lambda h: (0, 0))],
            out_specs=pl.BlockSpec((N, E), lambda h: (0, 0)),
            scratch_shapes=[pltpu.VMEM((N, C), jnp.float32)],
        ),
        compiler_params=pltpu.CompilerParams(
            dimension_semantics=("arbitrary",)),
    )


# ----------------------------------------------------------------------------
# Op wrappers (padding / tiling decisions + JAX glue)
# ----------------------------------------------------------------------------
def matmul_bias(a, b, bias=None):
    """(M,K)@(K,N)+bias as a gridded Pallas matmul (bf16 operands, f32 acc)."""
    M, K = a.shape
    N = b.shape[1]
    tm = min(256, _round_up(M, 16))
    tk = _pick_tk(K)
    tn = min(256, _round_up(N, 128))
    Mp, Kp, Np = _round_up(M, tm), _round_up(K, tk), _round_up(N, tn)
    a_p = a.astype(jnp.bfloat16)
    if (Mp, Kp) != (M, K):
        a_p = jnp.pad(a_p, ((0, Mp - M), (0, Kp - K)))
    b_p = b.astype(jnp.bfloat16)
    if (Kp, Np) != (K, N):
        b_p = jnp.pad(b_p, ((0, Kp - K), (0, Np - N)))
    if bias is not None:
        bias_p = bias.astype(jnp.float32).reshape(1, N)
        if Np != N:
            bias_p = jnp.pad(bias_p, ((0, 0), (0, Np - N)))
        out = _matmul_call(Mp, Kp, Np, tm, tk, tn, True)(a_p, b_p, bias_p)
    else:
        out = _matmul_call(Mp, Kp, Np, tm, tk, tn, False)(a_p, b_p)
    if (Mp, Np) != (M, N):
        out = out[:M, :N]
    return out


def _im2col(x, kh, kw, stride, pad):
    # TODO(synk): fold the kh*kw taps into the matmul K grid axis (per-tap
    # index_map offsets into the padded NHWC input) to avoid materializing the
    # kh*kw-times expanded patch tensor in HBM.
    N, H, W, C = x.shape
    xp = jnp.pad(x, ((0, 0), (pad, pad), (pad, pad), (0, 0)))
    OH = (H + 2 * pad - kh) // stride + 1
    OW = (W + 2 * pad - kw) // stride + 1
    cols = []
    for i in range(kh):
        for j in range(kw):
            cols.append(xp[:, i:i + stride * OH:stride,
                           j:j + stride * OW:stride, :])
    col = jnp.concatenate(cols, axis=-1)
    return col.reshape(N * OH * OW, kh * kw * C), OH, OW


def conv2d(x, w, b, stride, pad):
    # x: NHWC, w: (kh, kw, cin, cout) matching the im2col ordering.
    N = x.shape[0]
    kh, kw, cin, cout = w.shape
    if kh == 1 and kw == 1 and pad == 0:
        xs = x[:, ::stride, ::stride, :]          # pointwise: no im2col needed
        OH, OW = xs.shape[1], xs.shape[2]
        col = xs.reshape(N * OH * OW, cin)
    else:
        col, OH, OW = _im2col(x, kh, kw, stride, pad)
    out = matmul_bias(col, w.reshape(kh * kw * cin, cout), b)
    return out.reshape(N, OH, OW, cout)


def batchnorm_act(x, gamma, beta, relu, out_dtype=jnp.float32):
    """Training-mode BatchNorm (+optional ReLU): tiled two-pass
    (sum/sumsq reduction kernel, then fused normalize+activation kernel).
    When C < 128 the (M, C) slab is folded to (M/f, f*C) for lane-dense
    loads/stores; stats are exact (fold-sum done in JAX glue)."""
    out_dtype = jnp.dtype(out_dtype)
    shape = x.shape
    C = shape[-1]
    x2d = x.reshape(-1, C).astype(jnp.float32)
    M = x2d.shape[0]

    f = 128 // C if (C < 128 and 128 % C == 0) else 1
    Cf = C * f
    Mf = -(-M // f)                               # folded rows needed
    tm = _row_tile(Mf, Cf * 4)
    Mfp = _round_up(Mf, tm)
    Mp = Mfp * f
    if Mp != M:
        x2d = jnp.pad(x2d, ((0, Mp - M), (0, 0)))  # zero rows: sums unaffected
    xf = x2d.reshape(Mfp, Cf)

    ssum_f, ssq_f = _bn_stats_call(Mfp, Cf, tm)(xf)
    ssum = ssum_f.reshape(f, C).sum(axis=0)
    ssq = ssq_f.reshape(f, C).sum(axis=0)
    mean = ssum / M
    var = ssq / M - mean * mean                    # biased var (PyTorch train)
    scale = gamma * jax.lax.rsqrt(var + _EPS)
    shift = beta - mean * scale
    scale_f = jnp.tile(scale.reshape(1, C), (1, f)).astype(jnp.float32)
    shift_f = jnp.tile(shift.reshape(1, C), (1, f)).astype(jnp.float32)

    y = _affine_call(Mfp, Cf, tm, bool(relu), out_dtype.name)(
        xf, scale_f, shift_f)
    y = y.reshape(Mp, C)
    if Mp != M:
        y = y[:M]
    return y.reshape(shape)


def se_block(x2, w1, b1, w2, b2):
    """Fused SEBlock: tiled GAP accumulation + excitation MLP + sigmoid."""
    N, H, W, C = x2.shape
    HW = H * W
    R = w1.shape[1]
    thw = _row_tile(HW, N * C * 4)
    HWp = _round_up(HW, thw)
    xr = x2.reshape(N, HW, C).astype(jnp.float32)
    if HWp != HW:
        xr = jnp.pad(xr, ((0, 0), (0, HWp - HW), (0, 0)))
    return _gap_se_call(N, HWp, C, R, thw, 1.0 / HW)(
        xr, w1, b1.reshape(1, R), w2, b2.reshape(1, C))


def se_residual(x2, s, x1):
    # x2, x1: (N, HW, C), s: (N, C);  out = x2 * s + x1
    N, HW, C = x2.shape
    thw = _row_tile(HW, C * 4)
    HWp = _round_up(HW, thw)
    if HWp != HW:
        pad = ((0, 0), (0, HWp - HW), (0, 0))
        x2 = jnp.pad(x2, pad)
        x1 = jnp.pad(x1, pad)
    out = _se_res_call(N, HWp, C, thw)(x2, s.reshape(N, 1, C), x1)
    if HWp != HW:
        out = out[:, :HW, :]
    return out


def head(x, w, b, gamma, beta):
    """Fused GAP + Linear(512, E) + BatchNorm1d(E) (training-mode stats)."""
    N, H, W, C = x.shape
    HW = H * W
    E = w.shape[1]
    thw = _row_tile(HW, N * C * 4)
    HWp = _round_up(HW, thw)
    xr = x.reshape(N, HW, C).astype(jnp.float32)
    if HWp != HW:
        xr = jnp.pad(xr, ((0, 0), (0, HWp - HW), (0, 0)))
    return _head_call(N, HWp, C, E, thw, 1.0 / HW)(
        xr, w.astype(jnp.float32), b.reshape(1, E).astype(jnp.float32),
        gamma.reshape(1, E).astype(jnp.float32),
        beta.reshape(1, E).astype(jnp.float32))


def residue_block(x, p):
    first = p["first"]
    stride = 2 if first else 1
    # start: BN(in) + ReLU  (bf16 output feeds the MXU convs only)
    xa = batchnorm_act(x, p["bn0_g"], p["bn0_b"], relu=True,
                       out_dtype=jnp.bfloat16)
    x1 = conv2d(xa, p["pw_w"], p["pw_b"], stride, 0)         # pointwise 1x1
    y = conv2d(xa, p["c1_w"], p["c1_b"], stride, 1)          # 3x3 (in,in)
    ya = batchnorm_act(y, p["bn1_g"], p["bn1_b"], relu=True,
                       out_dtype=jnp.bfloat16)
    x2 = conv2d(ya, p["c2_w"], p["c2_b"], 1, 1)              # 3x3 (in,out)
    s = se_block(x2, p["se_w1"], p["se_b1"], p["se_w2"], p["se_b2"])
    N, H, W, C = x2.shape
    out = se_residual(x2.reshape(N, H * W, C), s, x1.reshape(N, H * W, C))
    return out.reshape(N, H, W, C)


# ----------------------------------------------------------------------------
# Deterministic parameter initialization (shapes follow the PyTorch __init__)
# ----------------------------------------------------------------------------
def _conv_init(key, cin, cout, k):
    # kaiming_normal_(mode='fan_out', nonlinearity='relu')
    std = (2.0 / (cout * k * k)) ** 0.5
    w = std * jax.random.normal(key, (k, k, cin, cout), dtype=jnp.float32)
    b = jnp.zeros((cout,), jnp.float32)
    return w, b


def _linear_init(key, cin, cout):
    k1, k2 = jax.random.split(key)
    bound = 1.0 / (cin ** 0.5)
    w = jax.random.uniform(k1, (cin, cout), jnp.float32, -bound, bound)
    b = jax.random.uniform(k2, (cout,), jnp.float32, -bound, bound)
    return w, b


def _init_block(keys, in_c, out_c, first):
    p = {"first": first}
    p["bn0_g"] = jnp.ones((in_c,), jnp.float32)
    p["bn0_b"] = jnp.zeros((in_c,), jnp.float32)
    p["pw_w"], p["pw_b"] = _conv_init(next(keys), in_c, out_c, 1)
    p["c1_w"], p["c1_b"] = _conv_init(next(keys), in_c, in_c, 3)
    p["bn1_g"] = jnp.ones((in_c,), jnp.float32)
    p["bn1_b"] = jnp.zeros((in_c,), jnp.float32)
    p["c2_w"], p["c2_b"] = _conv_init(next(keys), in_c, out_c, 3)
    r = out_c // 16
    p["se_w1"], p["se_b1"] = _linear_init(next(keys), out_c, r)
    p["se_w2"], p["se_b2"] = _linear_init(next(keys), r, out_c)
    return p


def init_params(key, embedding):
    keys = iter(jax.random.split(key, 256))
    params = {}
    # first: Conv2d(3, 64, 7, stride=2, padding=3, bias=False) + BN(64) + ReLU
    params["first_w"], _ = _conv_init(next(keys), 3, 64, 7)
    params["first_bn_g"] = jnp.ones((64,), jnp.float32)
    params["first_bn_b"] = jnp.zeros((64,), jnp.float32)

    conv_list = [64, 128, 256, 512]
    stages = [(conv_list[0], conv_list[0], 3),
              (conv_list[0], conv_list[1], 4),
              (conv_list[1], conv_list[2], 6),
              (conv_list[2], conv_list[3], 3)]
    blocks = []
    for in_c, out_c, n in stages:
        for i in range(n):
            if i == 0:
                blocks.append(_init_block(keys, in_c, out_c, first=True))
            else:
                blocks.append(_init_block(keys, out_c, out_c, first=False))
    params["blocks"] = blocks

    # embedding: Linear(512, embedding) + BatchNorm1d(embedding)
    params["emb_w"], params["emb_b"] = _linear_init(next(keys), 512, embedding)
    params["emb_bn_g"] = jnp.ones((embedding,), jnp.float32)
    params["emb_bn_b"] = jnp.zeros((embedding,), jnp.float32)
    return params


# ----------------------------------------------------------------------------
# Full forward pass (SEResent34.forward)
# ----------------------------------------------------------------------------
def se_resnet34_forward(params, x_nchw):
    # Convert PyTorch NCHW input to NHWC for the kernels.
    x = jnp.transpose(x_nchw, (0, 2, 3, 1)).astype(jnp.float32)
    x = conv2d(x, params["first_w"], None, stride=2, pad=3)   # bias=False
    x = batchnorm_act(x, params["first_bn_g"], params["first_bn_b"], relu=True)
    for blk in params["blocks"]:
        x = residue_block(x, blk)
    # Fused GAP + Linear(512, E) + BatchNorm1d(E)
    return head(x, params["emb_w"], params["emb_b"],
                params["emb_bn_g"], params["emb_bn_b"])


if __name__ == "__main__":
    key = jax.random.PRNGKey(0)
    pkey, xkey = jax.random.split(key)

    EMBEDDING = 64
    params = init_params(pkey, embedding=EMBEDDING)

    # Small input consistent with the module: batch=2, 3 channels, 16x16 spatial
    x = jax.random.normal(xkey, (2, 3, 16, 16), dtype=jnp.float32)  # NCHW

    out = se_resnet34_forward(params, x)
    out = jax.block_until_ready(out)

    assert out.shape == (2, EMBEDDING), out.shape
    assert bool(jnp.all(jnp.isfinite(out)))
    print("KERNEL_OK")
</pallas_src>

<mosaic_0001>
module attributes {stable_mosaic.version = 11 : i64} {
  func.func @_matmul_kernel(%arg0: i32, %arg1: i32, %arg2: i32, %arg3: memref<128x256xbf16, #tpu.memory_space<vmem>>, %arg4: memref<256x128xbf16, #tpu.memory_space<vmem>>, %arg5: memref<128x128xf32, #tpu.memory_space<vmem>>, %arg6: memref<128x128xf32, #tpu.memory_space<vmem>>) attributes {dimension_semantics = [#tpu.dimension_semantics<parallel>, #tpu.dimension_semantics<parallel>, #tpu.dimension_semantics<arbitrary>], iteration_bounds = array<i64: 1, 1, 1>, scalar_prefetch = 0 : i64, scratch_operands = 1 : i64, tpu.core_type = #tpu.core_type<tc>, window_params = [{transform_indices = @transform_0, window_bounds = array<i64: 128, 256>}, {transform_indices = @transform_1, window_bounds = array<i64: 256, 128>}, {transform_indices = @transform_2, window_bounds = array<i64: 128, 128>}]} {
    %c0_i32 = arith.constant 0 : i32
    %0 = arith.cmpi eq, %arg2, %c0_i32 : i32
    %1 = arith.extui %0 : i1 to i32
    %c0_i32_0 = arith.constant 0 : i32
    %2 = arith.cmpi ne, %1, %c0_i32_0 : i32
    scf.if %2 {
      %cst_10 = arith.constant 0.000000e+00 : f32
      %12 = vector.broadcast %cst_10 : f32 to vector<128x128xf32>
      %c0_11 = arith.constant 0 : index
      %c0_12 = arith.constant 0 : index
      %13 = vector.load %arg6[%c0_11, %c0_12] : memref<128x128xf32, #tpu.memory_space<vmem>>, vector<128x128xf32>
      tpu.vector_store %arg6[%c0_11, %c0_12], %12 {strides = array<i32>} : memref<128x128xf32, #tpu.memory_space<vmem>>, vector<128x128xf32>,
    } else {
    }
    %c0 = arith.constant 0 : index
    %c0_1 = arith.constant 0 : index
    %3 = vector.load %arg6[%c0, %c0_1] : memref<128x128xf32, #tpu.memory_space<vmem>>, vector<128x128xf32>
    %c0_2 = arith.constant 0 : index
    %c0_3 = arith.constant 0 : index
    %4 = vector.load %arg3[%c0_2, %c0_3] : memref<128x256xbf16, #tpu.memory_space<vmem>>, vector<128x256xbf16>
    %c0_4 = arith.constant 0 : index
    %c0_5 = arith.constant 0 : index
    %5 = vector.load %arg4[%c0_4, %c0_5] : memref<256x128xbf16, #tpu.memory_space<vmem>>, vector<256x128xbf16>
    %cst = arith.constant dense<0.000000e+00> : vector<128x128xf32>
    %6 = tpu.matmul %4, %5, %cst {dimension_numbers = #tpu.dot_dimension_numbers<[1], [0], [0], [1], [0, 0, 1, 1], [], []>} : vector<128x256xbf16>, vector<256x128xbf16>, vector<128x128xf32> -> vector<128x128xf32>
    %7 = arith.addf %3, %6 : vector<128x128xf32>
    %c0_6 = arith.constant 0 : index
    %c0_7 = arith.constant 0 : index
    %8 = vector.load %arg6[%c0_6, %c0_7] : memref<128x128xf32, #tpu.memory_space<vmem>>, vector<128x128xf32>
    tpu.vector_store %arg6[%c0_6, %c0_7], %7 {strides = array<i32>} : memref<128x128xf32, #tpu.memory_space<vmem>>, vector<128x128xf32>,
    %c0_i32_8 = arith.constant 0 : i32
    %9 = arith.cmpi eq, %arg2, %c0_i32_8 : i32
    %10 = arith.extui %9 : i1 to i32
    %c0_i32_9 = arith.constant 0 : i32
    %11 = arith.cmpi ne, %10, %c0_i32_9 : i32
    scf.if %11 {
      %c0_10 = arith.constant 0 : index
      %c0_11 = arith.constant 0 : index
      %12 = vector.load %arg6[%c0_10, %c0_11] : memref<128x128xf32, #tpu.memory_space<vmem>>, vector<128x128xf32>
      %c0_12 = arith.constant 0 : index
      %c0_13 = arith.constant 0 : index
      %13 = vector.load %arg5[%c0_12, %c0_13] : memref<128x128xf32, #tpu.memory_space<vmem>>, vector<128x128xf32>
      tpu.vector_store %arg5[%c0_12, %c0_13], %12 {strides = array<i32>} : memref<128x128xf32, #tpu.memory_space<vmem>>, vector<128x128xf32>,
    } else {
    }
    return
  }
  func.func @transform_0(%arg0: i32, %arg1: i32, %arg2: i32) -> (i32, i32) {
    %c0_i32 = arith.constant 0 : i32
    return %arg0, %arg2 : i32, i32
  }
  func.func @transform_1(%arg0: i32, %arg1: i32, %arg2: i32) -> (i32, i32) {
    %c0_i32 = arith.constant 0 : i32
    return %arg2, %arg1 : i32, i32
  }
  func.func @transform_2(%arg0: i32, %arg1: i32, %arg2: i32) -> (i32, i32) {
    %c0_i32 = arith.constant 0 : i32
    return %arg0, %arg1 : i32, i32
  }
}

</mosaic_0001>

<llo_original>
// kernel: tpu_custom_call.1
$region0: #{tpu_custom_call.1}
  #allocation0 [shape = 'u32[]', space=smem, size = 0x4, offset = 0x4, fixed_abs, tag = 'smem constant byte address 0x4 - core index']
  #allocation1 [shape = 'u32[144,128]{1,0:T(1,128)}', space=vmem, size = 0x12000, scoped, tag = 'internal scratch']
  #allocation2 [shape = 'f32[128,128]{1,0:T(8,128)}', space=vmem, size = 0x10000, scoped, tag = 'scratch operand']
  %s0 = inlined_call_operand.hbm [shape: bf16[128,256], index: 0, kind: input, shape index: {}]
  %s1 = inlined_call_operand.hbm [shape: bf16[256,128], index: 1, kind: input, shape index: {}]
  %s2 = inlined_call_operand.hbm [shape: f32[128,128], index: 2, kind: output, shape index: {}]
  %s3 = sld [smem:[#allocation0]]
  $region34: #{tpu_custom_call.1} parent=0
    _
  %s5 = ssub.s32 1, %s3
  %s6 = scalar_select 0, %s5, %s3
  $region1: #{tpu_custom_call.1} parent=0
    #allocation3 [shape = 'u8[65536]{0}', space=vmem, size = 0x10000, scoped, tag = 'input window, operand 0, single buffered']
    #allocation4 [shape = 's32[1]{0}', space=sflag, size = 0x4, scoped, tag = 'scoped memory for tpu_custom_call.1']
    #allocation5 [shape = 's32[1]{0}', space=sflag, size = 0x4, scoped, tag = 'scoped memory for tpu_custom_call.1']
    #allocation6 [shape = 'u8[65536]{0}', space=vmem, size = 0x10000, scoped, tag = 'input window, operand 1, single buffered']
    #allocation7 [shape = 's32[1]{0}', space=sflag, size = 0x4, scoped, tag = 'scoped memory for tpu_custom_call.1']
    #allocation8 [shape = 'u8[65536]{0}', space=vmem, size = 0x10000, scoped, tag = 'output window, operand 0, single buffered']
    %7 = vsyncpa [#allocation4], 0
    %8 = vsyncpa [#allocation7], 0
    %9 = vsyncpa [#allocation5], 0
    // Predicated region
    $region2: #{tpu_custom_call.1} parent=1 // pred_check
      _
    $region3: #{tpu_custom_call.1} parent=1 // pred_check_branch
      %11 = sbr.rel (0) target = $region5
    $region4: #{tpu_custom_call.1} parent=1 // pred_region
      %s13 = ssub.s32 2048, 2048
      %14 = vsyncadd [#allocation4], %s13
      %s15 = sshll.u32 [#allocation3], 4
      %s16 = int_to_ptr.vmem [resolvable:$true] %s15
      %21 = dma.hbm_to_vmem [thread:$0]  %s0, 2048, %s16, [#allocation4], 128, 128, 8
    $region5: #{tpu_custom_call.1} parent=1 // pred_fallthru
      _
    // Predicated region
    $region6: #{tpu_custom_call.1} parent=1 // pred_check
      _
    $region7: #{tpu_custom_call.1} parent=1 // pred_check_branch
      %23 = sbr.rel (0) target = $region9
    $region8: #{tpu_custom_call.1} parent=1 // pred_region
      %s25 = ssub.s32 2048, 2048
      %26 = vsyncadd [#allocation7], %s25
      %s27 = sshll.u32 [#allocation6], 4
      %s28 = int_to_ptr.vmem [resolvable:$true] %s27
      %33 = dma.hbm_to_vmem [thread:$0]  %s1, 2048, %s28, [#allocation7], 64, 64, 4
    $region9: #{tpu_custom_call.1} parent=1 // pred_fallthru
      _
    // Predicated region
    $region10: #{tpu_custom_call.1} parent=1 // pred_check
      _
    $region11: #{tpu_custom_call.1} parent=1 // pred_check_branch
      %35 = sbr.rel (0) target = $region13
    $region12: #{tpu_custom_call.1} parent=1 // pred_region
      %36 = dma.done [#allocation4], 2048
    $region13: #{tpu_custom_call.1} parent=1 // pred_fallthru
      _
    // Predicated region
    $region14: #{tpu_custom_call.1} parent=1 // pred_check
      _
    $region15: #{tpu_custom_call.1} parent=1 // pred_check_branch
      %38 = sbr.rel (0) target = $region17
    $region16: #{tpu_custom_call.1} parent=1 // pred_region
      %39 = dma.done [#allocation7], 2048
    $region17: #{tpu_custom_call.1} parent=1 // pred_fallthru
      _
    %p41 = scmp.eq.s32.totalorder 0, 0
    // Predicated region
    $region18: #{tpu_custom_call.1} parent=1 // pred_check
      %p42 = pneg %p41
    $region19: #{tpu_custom_call.1} parent=1 // pred_check_branch
      %44 = sbr.rel (%p42) target = $region21
    $region20: #{tpu_custom_call.1} parent=1 // pred_region
      %45 = vst [vmem:[#allocation2] sm:$0xff] 0.0
      %46 = vst [vmem:[#allocation2 + $0x8] sm:$0xff] 0.0
      %47 = vst [vmem:[#allocation2 + $0x10] sm:$0xff] 0.0
      %48 = vst [vmem:[#allocation2 + $0x18] sm:$0xff] 0.0
      %49 = vst [vmem:[#allocation2 + $0x20] sm:$0xff] 0.0
      %50 = vst [vmem:[#allocation2 + $0x28] sm:$0xff] 0.0
      %51 = vst [vmem:[#allocation2 + $0x30] sm:$0xff] 0.0
      %52 = vst [vmem:[#allocation2 + $0x38] sm:$0xff] 0.0
      %53 = vst [vmem:[#allocation2 + $0x40] sm:$0xff] 0.0
      %54 = vst [vmem:[#allocation2 + $0x48] sm:$0xff] 0.0
      %55 = vst [vmem:[#allocation2 + $0x50] sm:$0xff] 0.0
      %56 = vst [vmem:[#allocation2 + $0x58] sm:$0xff] 0.0
      %57 = vst [vmem:[#allocation2 + $0x60] sm:$0xff] 0.0
      %58 = vst [vmem:[#allocation2 + $0x68] sm:$0xff] 0.0
      %59 = vst [vmem:[#allocation2 + $0x70] sm:$0xff] 0.0
      %60 = vst [vmem:[#allocation2 + $0x78] sm:$0xff] 0.0
    $region21: #{tpu_custom_call.1} parent=1 // pred_fallthru
      _
    %v61 = vld [vmem:[#allocation2] sm:$0xff]
    %v62 = vld [vmem:[#allocation2 + $0x8] sm:$0xff]
    %v63 = vld [vmem:[#allocation2 + $0x10] sm:$0xff]
    %v64 = vld [vmem:[#allocation2 + $0x18] sm:$0xff]
    %v65 = vld [vmem:[#allocation2 + $0x20] sm:$0xff]
    %v66 = vld [vmem:[#allocation2 + $0x28] sm:$0xff]
    %v67 = vld [vmem:[#allocation2 + $0x30] sm:$0xff]
    %v68 = vld [vmem:[#allocation2 + $0x38] sm:$0xff]
    %v69 = vld [vmem:[#allocation2 + $0x40] sm:$0xff]
    %v70 = vld [vmem:[#allocation2 + $0x48] sm:$0xff]
    %v71 = vld [vmem:[#allocation2 + $0x50] sm:$0xff]
    %v72 = vld [vmem:[#allocation2 + $0x58] sm:$0xff]
    %v73 = vld [vmem:[#allocation2 + $0x60] sm:$0xff]
    %v74 = vld [vmem:[#allocation2 + $0x68] sm:$0xff]
    %v75 = vld [vmem:[#allocation2 + $0x70] sm:$0xff]
    %v76 = vld [vmem:[#allocation2 + $0x78] sm:$0xff]
    %v77 = vld [vmem:[#allocation3] sm:$0xff]
    %v78 = vld [vmem:[#allocation3 + $0x8] sm:$0xff]
    %v79 = vld [vmem:[#allocation3 + $0x10] sm:$0xff]
    %v80 = vld [vmem:[#allocation3 + $0x18] sm:$0xff]
    %v81 = vld [vmem:[#allocation3 + $0x20] sm:$0xff]
    %v82 = vld [vmem:[#allocation3 + $0x28] sm:$0xff]
    %v83 = vld [vmem:[#allocation3 + $0x30] sm:$0xff]
    %v84 = vld [vmem:[#allocation3 + $0x38] sm:$0xff]
    %v85 = vld [vmem:[#allocation3 + $0x40] sm:$0xff]
    %v86 = vld [vmem:[#allocation3 + $0x48] sm:$0xff]
    %v87 = vld [vmem:[#allocation3 + $0x50] sm:$0xff]
    %v88 = vld [vmem:[#allocation3 + $0x58] sm:$0xff]
    %v89 = vld [vmem:[#allocation3 + $0x60] sm:$0xff]
    %v90 = vld [vmem:[#allocation3 + $0x68] sm:$0xff]
    %v91 = vld [vmem:[#allocation3 + $0x70] sm:$0xff]
    %v92 = vld [vmem:[#allocation3 + $0x78] sm:$0xff]
    %v93 = vld [vmem:[#allocation6] sm:$0xf]
    %v94 = vld [vmem:[#allocation6 + $0x4] sm:$0xf]
    %v95 = vld [vmem:[#allocation6 + $0x8] sm:$0xf]
    %v96 = vld [vmem:[#allocation6 + $0xc] sm:$0xf]
    %v97 = vld [vmem:[#allocation6 + $0x10] sm:$0xf]
    %v98 = vld [vmem:[#allocation6 + $0x14] sm:$0xf]
    %v99 = vld [vmem:[#allocation6 + $0x18] sm:$0xf]
    %v100 = vld [vmem:[#allocation6 + $0x1c] sm:$0xf]
    %v101 = vld [vmem:[#allocation6 + $0x20] sm:$0xf]
    %v102 = vld [vmem:[#allocation6 + $0x24] sm:$0xf]
    %v103 = vld [vmem:[#allocation6 + $0x28] sm:$0xf]
    %v104 = vld [vmem:[#allocation6 + $0x2c] sm:$0xf]
    %v105 = vld [vmem:[#allocation6 + $0x30] sm:$0xf]
    %v106 = vld [vmem:[#allocation6 + $0x34] sm:$0xf]
    %v107 = vld [vmem:[#allocation6 + $0x38] sm:$0xf]
    %v108 = vld [vmem:[#allocation6 + $0x3c] sm:$0xf]
    %v109 = vld [vmem:[#allocation6 + $0x40] sm:$0xf]
    %v110 = vld [vmem:[#allocation6 + $0x44] sm:$0xf]
    %v111 = vld [vmem:[#allocation6 + $0x48] sm:$0xf]
    %v112 = vld [vmem:[#allocation6 + $0x4c] sm:$0xf]
    %v113 = vld [vmem:[#allocation6 + $0x50] sm:$0xf]
    %v114 = vld [vmem:[#allocation6 + $0x54] sm:$0xf]
    %v115 = vld [vmem:[#allocation6 + $0x58] sm:$0xf]
    %v116 = vld [vmem:[#allocation6 + $0x5c] sm:$0xf]
    %v117 = vld [vmem:[#allocation6 + $0x60] sm:$0xf]
    %v118 = vld [vmem:[#allocation6 + $0x64] sm:$0xf]
    %v119 = vld [vmem:[#allocation6 + $0x68] sm:$0xf]
    %v120 = vld [vmem:[#allocation6 + $0x6c] sm:$0xf]
    %v121 = vld [vmem:[#allocation6 + $0x70] sm:$0xf]
    %v122 = vld [vmem:[#allocation6 + $0x74] sm:$0xf]
    %v123 = vld [vmem:[#allocation6 + $0x78] sm:$0xf]
    %v124 = vld [vmem:[#allocation6 + $0x7c] sm:$0xf]
    %v141 = vunpack.c.l.b16 %v77
    %v142 = vunpack.c.h.b16 %v77
    %v143 = vunpack.c.l.b16 %v78
    %v144 = vunpack.c.h.b16 %v78
    %v145 = vunpack.c.l.b16 %v79
    %v146 = vunpack.c.h.b16 %v79
    %v147 = vunpack.c.l.b16 %v80
    %v148 = vunpack.c.h.b16 %v80
    %v149 = vunpack.c.l.b16 %v81
    %v150 = vunpack.c.h.b16 %v81
    %v151 = vunpack.c.l.b16 %v82
    %v152 = vunpack.c.h.b16 %v82
    %v153 = vunpack.c.l.b16 %v83
    %v154 = vunpack.c.h.b16 %v83
    %v155 = vunpack.c.l.b16 %v84
    %v156 = vunpack.c.h.b16 %v84
    %v157 = vunpack.c.l.b16 %v85
    %v158 = vunpack.c.h.b16 %v85
    %v159 = vunpack.c.l.b16 %v86
    %v160 = vunpack.c.h.b16 %v86
    %v161 = vunpack.c.l.b16 %v87
    %v162 = vunpack.c.h.b16 %v87
    %v163 = vunpack.c.l.b16 %v88
    %v164 = vunpack.c.h.b16 %v88
    %v165 = vunpack.c.l.b16 %v89
    %v166 = vunpack.c.h.b16 %v89
    %v167 = vunpack.c.l.b16 %v90
    %v168 = vunpack.c.h.b16 %v90
    %v169 = vunpack.c.l.b16 %v91
    %v170 = vunpack.c.h.b16 %v91
    %v171 = vunpack.c.l.b16 %v92
    %v172 = vunpack.c.h.b16 %v92
    %v173 = vpack.c.b16 %v143, %v141
    %v174 = vpack.c.b16 %v144, %v142
    %v175 = vpack.c.b16 %v147, %v145
    %v176 = vpack.c.b16 %v148, %v146
    %v177 = vpack.c.b16 %v151, %v149
    %v178 = vpack.c.b16 %v152, %v150
    %v179 = vpack.c.b16 %v155, %v153
    %v180 = vpack.c.b16 %v156, %v154
    %v181 = vpack.c.b16 %v159, %v157
    %v182 = vpack.c.b16 %v160, %v158
    %v183 = vpack.c.b16 %v163, %v161
    %v184 = vpack.c.b16 %v164, %v162
    %v185 = vpack.c.b16 %v167, %v165
    %v186 = vpack.c.b16 %v168, %v166
    %v187 = vpack.c.b16 %v171, %v169
    %v188 = vpack.c.b16 %v172, %v170
    %v237 = vunpack.c.l.b16 %v93
    %v238 = vunpack.c.l.b16 %v94
    %v239 = vunpack.c.l.b16 %v95
    %v240 = vunpack.c.l.b16 %v96
    %v241 = vunpack.c.l.b16 %v97
    %v242 = vunpack.c.l.b16 %v98
    %v243 = vunpack.c.l.b16 %v99
    %v244 = vunpack.c.l.b16 %v100
    %v245 = vunpack.c.l.b16 %v101
    %v246 = vunpack.c.l.b16 %v102
    %v247 = vunpack.c.l.b16 %v103
    %v248 = vunpack.c.l.b16 %v104
    %v249 = vunpack.c.l.b16 %v105
    %v250 = vunpack.c.l.b16 %v106
    %v251 = vunpack.c.l.b16 %v107
    %v252 = vunpack.c.l.b16 %v108
    %v253 = vunpack.c.l.b16 %v109
    %v254 = vunpack.c.l.b16 %v110
    %v255 = vunpack.c.l.b16 %v111
    %v256 = vunpack.c.l.b16 %v112
    %v257 = vunpack.c.l.b16 %v113
    %v258 = vunpack.c.l.b16 %v114
    %v259 = vunpack.c.l.b16 %v115
    %v260 = vunpack.c.l.b16 %v116
    %v261 = vunpack.c.l.b16 %v117
    %v262 = vunpack.c.l.b16 %v118
    %v263 = vunpack.c.l.b16 %v119
    %v264 = vunpack.c.l.b16 %v120
    %v265 = vunpack.c.l.b16 %v121
    %v266 = vunpack.c.l.b16 %v122
    %v267 = vunpack.c.l.b16 %v123
    %v268 = vunpack.c.l.b16 %v124
    %v269 = vpack.c.b16 %v238, %v237
    %v270 = vpack.c.b16 %v240, %v239
    %v271 = vpack.c.b16 %v242, %v241
    %v272 = vpack.c.b16 %v244, %v243
    %v273 = vpack.c.b16 %v246, %v245
    %v274 = vpack.c.b16 %v248, %v247
    %v275 = vpack.c.b16 %v250, %v249
    %v276 = vpack.c.b16 %v252, %v251
    %v277 = vpack.c.b16 %v254, %v253
    %v278 = vpack.c.b16 %v256, %v255
    %v279 = vpack.c.b16 %v258, %v257
    %v280 = vpack.c.b16 %v260, %v259
    %v281 = vpack.c.b16 %v262, %v261
    %v282 = vpack.c.b16 %v264, %v263
    %v283 = vpack.c.b16 %v266, %v265
    %v284 = vpack.c.b16 %v268, %v267
    %301 = vmatprep.subr.bf16.mxu0 0
    %302 = vmatpush1.bf16.msra.mxu0 %v276
    %303 = vmatprep.subr.bf16.mxu0 0
    %304 = vmatpush1.bf16.msra.mxu0 %v275
    %305 = vmatprep.subr.bf16.mxu0 0
    %306 = vmatpush1.bf16.msra.mxu0 %v274
    %307 = vmatprep.subr.bf16.mxu0 0
    %308 = vmatpush1.bf16.msra.mxu0 %v273
    %309 = vmatprep.subr.bf16.mxu0 0
    %310 = vmatpush1.bf16.msra.mxu0 %v272
    %311 = vmatprep.subr.bf16.mxu0 0
    %312 = vmatpush1.bf16.msra.mxu0 %v271
    %313 = vmatprep.subr.bf16.mxu0 0
    %314 = vmatpush1.bf16.msra.mxu0 %v270
    %315 = vmatprep.subr.bf16.mxu0 0
    %316 = vmatpush1.bf16.msra.mxu0 %v269
    %317 = vmatprep.subr.bf16.mxu0 0
    %318 = vmatpush2.bf16.msra.mxu0 %v284
    %319 = vmatprep.subr.bf16.mxu0 0
    %320 = vmatpush2.bf16.msra.mxu0 %v283
    %321 = vmatprep.subr.bf16.mxu0 0
    %322 = vmatpush2.bf16.msra.mxu0 %v282
    %323 = vmatprep.subr.bf16.mxu0 0
    %324 = vmatpush2.bf16.msra.mxu0 %v281
    %325 = vmatprep.subr.bf16.mxu0 0
    %326 = vmatpush2.bf16.msra.mxu0 %v280
    %327 = vmatprep.subr.bf16.mxu0 0
    %328 = vmatpush2.bf16.msra.mxu0 %v279
    %329 = vmatprep.subr.bf16.mxu0 0
    %330 = vmatpush2.bf16.msra.mxu0 %v278
    %331 = vmatprep.subr.bf16.mxu0 0
    %332 = vmatpush2.bf16.msra.mxu0 %v277
    %333 = vmatprep.mubr.bf16.mxu0 %v174
    %334 = vmatmul.mubr.bf16.gmra.mxu0 %v173
    %v335 = vpop.f32.mrf.mxu0
    %v336 = vadd.f32 0.0, %v335
    %v337 = vpop.f32.mrf.mxu0
    %v338 = vpop.f32.mrf.mxu0
    %v339 = vadd.f32 0.0, %v338
    %v340 = vpop.f32.mrf.mxu0
    %341 = vmatprep.mubr.bf16.mxu0 %v176
    %342 = vmatmul.mubr.bf16.gmra.mxu0 %v175
    %v343 = vpop.f32.mrf.mxu0
    %v344 = vadd.f32 0.0, %v343
    %v345 = vpop.f32.mrf.mxu0
    %v346 = vpop.f32.mrf.mxu0
    %v347 = vadd.f32 0.0, %v346
    %v348 = vpop.f32.mrf.mxu0
    %349 = vmatprep.mubr.bf16.mxu0 %v178
    %350 = vmatmul.mubr.bf16.gmra.mxu0 %v177
    %v351 = vpop.f32.mrf.mxu0
    %v352 = vadd.f32 0.0, %v351
    %v353 = vpop.f32.mrf.mxu0
    %v354 = vpop.f32.mrf.mxu0
    %v355 = vadd.f32 0.0, %v354
    %v356 = vpop.f32.mrf.mxu0
    %357 = vmatprep.mubr.bf16.mxu0 %v180
    %358 = vmatmul.mubr.bf16.gmra.mxu0 %v179
    %v359 = vpop.f32.mrf.mxu0
    %v360 = vadd.f32 0.0, %v359
    %v361 = vpop.f32.mrf.mxu0
    %v362 = vpop.f32.mrf.mxu0
    %v363 = vadd.f32 0.0, %v362
    %v364 = vpop.f32.mrf.mxu0
    %365 = vmatprep.mubr.bf16.mxu0 %v182
    %366 = vmatmul.mubr.bf16.gmra.mxu0 %v181
    %v367 = vpop.f32.mrf.mxu0
    %v368 = vadd.f32 0.0, %v367
    %v369 = vpop.f32.mrf.mxu0
    %v370 = vpop.f32.mrf.mxu0
    %v371 = vadd.f32 0.0, %v370
    %v372 = vpop.f32.mrf.mxu0
    %373 = vmatprep.mubr.bf16.mxu0 %v184
    %374 = vmatmul.mubr.bf16.gmra.mxu0 %v183
    %v375 = vpop.f32.mrf.mxu0
    %v376 = vadd.f32 0.0, %v375
    %v377 = vpop.f32.mrf.mxu0
    %v378 = vpop.f32.mrf.mxu0
    %v379 = vadd.f32 0.0, %v378
    %v380 = vpop.f32.mrf.mxu0
    %381 = vmatprep.mubr.bf16.mxu0 %v186
    %382 = vmatmul.mubr.bf16.gmra.mxu0 %v185
    %v383 = vpop.f32.mrf.mxu0
    %v384 = vadd.f32 0.0, %v383
    %v385 = vpop.f32.mrf.mxu0
    %v386 = vpop.f32.mrf.mxu0
    %v387 = vadd.f32 0.0, %v386
    %v388 = vpop.f32.mrf.mxu0
    %389 = vmatprep.mubr.bf16.mxu0 %v188
    %390 = vmatmul.mubr.bf16.gmra.mxu0 %v187
    %v391 = vpop.f32.mrf.mxu0
    %v392 = vadd.f32 0.0, %v391
    %v393 = vpop.f32.mrf.mxu0
    %v394 = vpop.f32.mrf.mxu0
    %v395 = vadd.f32 0.0, %v394
    %v396 = vpop.f32.mrf.mxu0
    %397 = vdwg.mxu0
    %v398 = vadd.f32 %v61, %v336
    %v399 = vadd.f32 %v62, %v339
    %v400 = vadd.f32 %v63, %v344
    %v401 = vadd.f32 %v64, %v347
    %v402 = vadd.f32 %v65, %v352
    %v403 = vadd.f32 %v66, %v355
    %v404 = vadd.f32 %v67, %v360
    %v405 = vadd.f32 %v68, %v363
    %v406 = vadd.f32 %v69, %v368
    %v407 = vadd.f32 %v70, %v371
    %v408 = vadd.f32 %v71, %v376
    %v409 = vadd.f32 %v72, %v379
    %v410 = vadd.f32 %v73, %v384
    %v411 = vadd.f32 %v74, %v387
    %v412 = vadd.f32 %v75, %v392
    %v413 = vadd.f32 %v76, %v395
    %414 = vst [vmem:[#allocation2] sm:$0xff] %v398
    %415 = vst [vmem:[#allocation2 + $0x8] sm:$0xff] %v399
    %416 = vst [vmem:[#allocation2 + $0x10] sm:$0xff] %v400
    %417 = vst [vmem:[#allocation2 + $0x18] sm:$0xff] %v401
    %418 = vst [vmem:[#allocation2 + $0x20] sm:$0xff] %v402
    %419 = vst [vmem:[#allocation2 + $0x28] sm:$0xff] %v403
    %420 = vst [vmem:[#allocation2 + $0x30] sm:$0xff] %v404
    %421 = vst [vmem:[#allocation2 + $0x38] sm:$0xff] %v405
    %422 = vst [vmem:[#allocation2 + $0x40] sm:$0xff] %v406
    %423 = vst [vmem:[#allocation2 + $0x48] sm:$0xff] %v407
    %424 = vst [vmem:[#allocation2 + $0x50] sm:$0xff] %v408
    %425 = vst [vmem:[#allocation2 + $0x58] sm:$0xff] %v409
    %426 = vst [vmem:[#allocation2 + $0x60] sm:$0xff] %v410
    %427 = vst [vmem:[#allocation2 + $0x68] sm:$0xff] %v411
    %428 = vst [vmem:[#allocation2 + $0x70] sm:$0xff] %v412
    %429 = vst [vmem:[#allocation2 + $0x78] sm:$0xff] %v413
    // Predicated region
    $region22: #{tpu_custom_call.1} parent=1 // pred_check
      %p430 = pneg %p41
    $region23: #{tpu_custom_call.1} parent=1 // pred_check_branch
      %432 = sbr.rel (%p430) target = $region25
    $region24: #{tpu_custom_call.1} parent=1 // pred_region
      %v433 = vld [vmem:[#allocation2] sm:$0xff]
      %v434 = vld [vmem:[#allocation2 + $0x8] sm:$0xff]
      %v435 = vld [vmem:[#allocation2 + $0x10] sm:$0xff]
      %v436 = vld [vmem:[#allocation2 + $0x18] sm:$0xff]
      %v437 = vld [vmem:[#allocation2 + $0x20] sm:$0xff]
      %v438 = vld [vmem:[#allocation2 + $0x28] sm:$0xff]
      %v439 = vld [vmem:[#allocation2 + $0x30] sm:$0xff]
      %v440 = vld [vmem:[#allocation2 + $0x38] sm:$0xff]
      %v441 = vld [vmem:[#allocation2 + $0x40] sm:$0xff]
      %v442 = vld [vmem:[#allocation2 + $0x48] sm:$0xff]
      %v443 = vld [vmem:[#allocation2 + $0x50] sm:$0xff]
      %v444 = vld [vmem:[#allocation2 + $0x58] sm:$0xff]
      %v445 = vld [vmem:[#allocation2 + $0x60] sm:$0xff]
      %v446 = vld [vmem:[#allocation2 + $0x68] sm:$0xff]
      %v447 = vld [vmem:[#allocation2 + $0x70] sm:$0xff]
      %v448 = vld [vmem:[#allocation2 + $0x78] sm:$0xff]
      %449 = vst [vmem:[#allocation8] sm:$0xff] %v433
      %450 = vst [vmem:[#allocation8 + $0x8] sm:$0xff] %v434
      %451 = vst [vmem:[#allocation8 + $0x10] sm:$0xff] %v435
      %452 = vst [vmem:[#allocation8 + $0x18] sm:$0xff] %v436
      %453 = vst [vmem:[#allocation8 + $0x20] sm:$0xff] %v437
      %454 = vst [vmem:[#allocation8 + $0x28] sm:$0xff] %v438
      %455 = vst [vmem:[#allocation8 + $0x30] sm:$0xff] %v439
      %456 = vst [vmem:[#allocation8 + $0x38] sm:$0xff] %v440
      %457 = vst [vmem:[#allocation8 + $0x40] sm:$0xff] %v441
      %458 = vst [vmem:[#allocation8 + $0x48] sm:$0xff] %v442
      %459 = vst [vmem:[#allocation8 + $0x50] sm:$0xff] %v443
      %460 = vst [vmem:[#allocation8 + $0x58] sm:$0xff] %v444
      %461 = vst [vmem:[#allocation8 + $0x60] sm:$0xff] %v445
      %462 = vst [vmem:[#allocation8 + $0x68] sm:$0xff] %v446
      %463 = vst [vmem:[#allocation8 + $0x70] sm:$0xff] %v447
      %464 = vst [vmem:[#allocation8 + $0x78] sm:$0xff] %v448
    $region25: #{tpu_custom_call.1} parent=1 // pred_fallthru
      _
    // Predicated region
    $region26: #{tpu_custom_call.1} parent=1 // pred_check
      _
    $region27: #{tpu_custom_call.1} parent=1 // pred_check_branch
      %466 = sbr.rel (0) target = $region29
    $region28: #{tpu_custom_call.1} parent=1 // pred_region
      %s468 = ssub.s32 2048, 2048
      %469 = vsyncadd [#allocation5], %s468
      %s470 = sshll.u32 [#allocation8], 4
      %s471 = int_to_ptr.vmem [resolvable:$true] %s470
      %476 = dma.vmem_to_hbm [thread:$0]  %s471, 2048, %s2, [#allocation5], 128, 128, 8
    $region29: #{tpu_custom_call.1} parent=1 // pred_fallthru
      _
    // Predicated region
    $region30: #{tpu_custom_call.1} parent=1 // pred_check
      _
    $region31: #{tpu_custom_call.1} parent=1 // pred_check_branch
      %478 = sbr.rel (0) target = $region33
    $region32: #{tpu_custom_call.1} parent=1 // pred_region
      %479 = dma.done [#allocation5], 2048
    $region33: #{tpu_custom_call.1} parent=1 // pred_fallthru
      _
    %480 = vsyncpa [#allocation4], 1
    %481 = vsyncpa [#allocation7], 1
    %482 = vsyncpa [#allocation5], 1

</llo_original>
